<compile_context>
chip_gen: v7x
topology: tpu7x:2x2x1
jax: 0.10.0
libtpu: 0.0.40
codegen_flags: <defaults>
</compile_context>

<pallas_src>
import math
from functools import partial

import jax
import jax.numpy as jnp
from jax.experimental import pallas as pl
from jax.experimental.pallas import tpu as pltpu


def _gfe_kernel(x_ref, freqs_ref, shift_ref, out_ref, *, g, two_nb):
    # x_ref:     (tm, g)        f32 -- g source scalars per packed output row
    # freqs_ref: (1, g*two_nb)  f32 -- [freqs, freqs] tiled g times (resident)
    # shift_ref: (1, g*two_nb)  f32 -- [0 .. 0, pi/2 .. pi/2] tiled g times
    # out_ref:   (tm, g*two_nb) f32 -- lane-dense (128-wide multiple when packed)
    tm = x_ref.shape[0]
    xg = x_ref[...]
    if g == 1:
        x_wide = xg  # (tm, 1), broadcasts against (1, two_nb) below
    else:
        # Static lane-broadcast of each packed column into its 2*n_basis slot,
        # then one concat along lanes: cheap VPU/XLU work vs. the sin polynomial.
        x_wide = jnp.concatenate(
            [jnp.broadcast_to(xg[:, j:j + 1], (tm, two_nb)) for j in range(g)],
            axis=-1,
        )
    # cos(p) == sin(p + pi/2): one fused transcendental, one full-width store.
    out_ref[...] = jnp.sin(x_wide * freqs_ref[...] + shift_ref[...])


def _pick_tile_rows(
    m_rows,
    out_width,
    *,
    target_block_bytes=2 * 1024 * 1024,
    vmem_budget_bytes=14 * 1024 * 1024,
):
    """Row-tile size for the (m_rows, out_width) f32 output.

    Big enough to amortize the ~0.35us/step grid overhead (target ~2 MiB output
    block), but budgeted so the double-buffered output PLUS in-kernel temporaries
    (x_wide, phase, sin result ~ 3-4 extra tiles) stay well inside every
    generation's scoped VMEM default (16 MiB v5e, 32 MiB v6e/v7x; 64 MiB/TC
    physical on v7x)."""
    row_bytes = out_width * 4
    cap = max(8, vmem_budget_bytes // (6 * row_bytes))  # ~6x one tile lives in VMEM
    tm = min(max(8, target_block_bytes // row_bytes), cap, m_rows)
    # Keep >= 4 grid steps when there is enough work so v7x's two TensorCores
    # both get fed (v5e/v6e single-TC: negligible effect at these block sizes).
    if m_rows >= 1024:
        tm = min(tm, max(8, ((-(-m_rows // 4)) // 8) * 8))
    if tm < m_rows:
        tm = max(8, (tm // 8) * 8)  # sublane-aligned; ragged last tile via cdiv
    return tm


def gaussian_fourier_encoding_1d(x, fourier_freqs):
    """x: (..., 1) float; fourier_freqs: (n_basis,) -> (..., 2*n_basis) float32."""
    assert x.shape[-1] == 1, "trailing dim must be 1 (broadcast against freqs)"
    n_basis = int(fourier_freqs.shape[0])
    two_nb = 2 * n_basis
    lead_shape = x.shape[:-1]
    M = int(math.prod(lead_shape)) if lead_shape else 1

    x_flat = x.reshape(M).astype(jnp.float32)
    freqs = fourier_freqs.astype(jnp.float32)

    # Fused cos: out = sin(x * freqs2 + shift), with shift = pi/2 on the cos half.
    freqs2 = jnp.concatenate([freqs, freqs])  # (2*n_basis,)
    shift2 = jnp.concatenate(
        [jnp.zeros((n_basis,), jnp.float32),
         jnp.full((n_basis,), 0.5 * math.pi, jnp.float32)]
    )

    # Lane packing: when the output row is narrower than a vreg lane row (128),
    # pack g = 128 // (2*n_basis) source rows per output row so every store is
    # a full-lane, unmasked vst and no VALU lanes are wasted.
    g = 1
    if two_nb < 128 and (128 % two_nb == 0):
        cand = 128 // two_nb
        if M % cand == 0:  # clean reshape; otherwise fall back to the g=1 path
            g = cand

    m_rows = M // g
    width = g * two_nb
    x2d = x_flat.reshape(m_rows, g)
    freqs_row = jnp.tile(freqs2, g).reshape(1, width)
    shift_row = jnp.tile(shift2, g).reshape(1, width)

    tm = _pick_tile_rows(m_rows, width)
    grid = (pl.cdiv(m_rows, tm),)  # ragged last tile: OOB writes dropped

    out = pl.pallas_call(
        partial(_gfe_kernel, g=g, two_nb=two_nb),
        out_shape=jax.ShapeDtypeStruct((m_rows, width), jnp.float32),
        grid_spec=pltpu.PrefetchScalarGridSpec(
            num_scalar_prefetch=0,
            grid=grid,
            in_specs=[
                pl.BlockSpec((tm, g), lambda i: (i, 0)),
                pl.BlockSpec((1, width), lambda i: (0, 0)),  # resident
                pl.BlockSpec((1, width), lambda i: (0, 0)),  # resident
            ],
            out_specs=pl.BlockSpec((tm, width), lambda i: (i, 0)),
        ),
        compiler_params=pltpu.CompilerParams(
            dimension_semantics=("parallel",)  # shards M across v7x's two TCs
        ),
    )(x2d, freqs_row, shift_row)

    # (M//g, g*2nb) row-major == (M, 2nb) row-major, so this reshape is free.
    return out.reshape(*lead_shape, two_nb)


def _reference(x, fourier_freqs):
    phase = x * fourier_freqs  # broadcast against trailing dim of size 1
    return jnp.concatenate([jnp.sin(phase), jnp.cos(phase)], axis=-1)


if __name__ == "__main__":
    key = jax.random.PRNGKey(0)
    k_freq, k_x1, k_x2 = jax.random.split(key, 3)

    n_basis = 32
    # deterministic parameter init, matching nn.Parameter(torch.randn(n_basis) * pi)
    fourier_freqs = jax.random.normal(k_freq, (n_basis,), dtype=jnp.float32) * math.pi

    # Case 1: small demo shape (M=16) -> packed (g=2) single-tile path.
    x_small = jax.random.normal(k_x1, (2, 8, 1), dtype=jnp.float32)
    out_small = jax.block_until_ready(
        gaussian_fourier_encoding_1d(x_small, fourier_freqs)
    )
    ref_small = _reference(x_small, fourier_freqs)
    assert out_small.shape == (2, 8, 2 * n_basis)
    assert jnp.allclose(out_small, ref_small, atol=1e-5), "mismatch (small case)"

    # Case 2: larger M, multi-tile packed path with a ragged last tile.
    x_ragged = jax.random.normal(k_x2, (3, 700, 1), dtype=jnp.float32)
    out_ragged = jax.block_until_ready(
        gaussian_fourier_encoding_1d(x_ragged, fourier_freqs)
    )
    ref_ragged = _reference(x_ragged, fourier_freqs)
    assert out_ragged.shape == (3, 700, 2 * n_basis)
    assert jnp.allclose(out_ragged, ref_ragged, atol=1e-5), "mismatch (ragged case)"

    print("KERNEL_OK")
</pallas_src>

<mosaic_0001>
module attributes {stable_mosaic.version = 11 : i64} {
  func.func @_gfe_kernel(%arg0: i32, %arg1: memref<8x2xf32, #tpu.memory_space<vmem>>, %arg2: memref<1x128xf32, #tpu.memory_space<vmem>>, %arg3: memref<1x128xf32, #tpu.memory_space<vmem>>, %arg4: memref<8x128xf32, #tpu.memory_space<vmem>>) attributes {dimension_semantics = [#tpu.dimension_semantics<parallel>], iteration_bounds = array<i64: 1>, scalar_prefetch = 0 : i64, scratch_operands = 0 : i64, tpu.core_type = #tpu.core_type<tc>, window_params = [{transform_indices = @transform_0, window_bounds = array<i64: 8, 2>}, {pipeline_mode = #tpu.pipeline_mode<synchronous>, transform_indices = @transform_1, window_bounds = array<i64: 1, 128>}, {pipeline_mode = #tpu.pipeline_mode<synchronous>, transform_indices = @transform_2, window_bounds = array<i64: 1, 128>}, {transform_indices = @transform_3, window_bounds = array<i64: 8, 128>}]} {
    %c0 = arith.constant 0 : index
    %c0_0 = arith.constant 0 : index
    %0 = vector.load %arg1[%c0, %c0_0] : memref<8x2xf32, #tpu.memory_space<vmem>>, vector<8x2xf32>
    %1 = vector.extract_strided_slice %0 {offsets = [0, 0], sizes = [8, 1], strides = [1, 1]} : vector<8x2xf32> to vector<8x1xf32>
    %2 = vector.shape_cast %1 : vector<8x1xf32> to vector<8x1xf32>
    %3 = vector.broadcast %2 : vector<8x1xf32> to vector<8x64xf32>
    %4 = vector.extract_strided_slice %0 {offsets = [0, 1], sizes = [8, 1], strides = [1, 1]} : vector<8x2xf32> to vector<8x1xf32>
    %5 = vector.shape_cast %4 : vector<8x1xf32> to vector<8x1xf32>
    %6 = vector.broadcast %5 : vector<8x1xf32> to vector<8x64xf32>
    %7 = tpu.concatenate %3, %6 in 1 : vector<8x64xf32>, vector<8x64xf32> -> vector<8x128xf32>
    %c0_1 = arith.constant 0 : index
    %c0_2 = arith.constant 0 : index
    %8 = vector.load %arg2[%c0_1, %c0_2] : memref<1x128xf32, #tpu.memory_space<vmem>>, vector<1x128xf32>
    %9 = vector.broadcast %8 : vector<1x128xf32> to vector<8x128xf32>
    %10 = arith.mulf %7, %9 : vector<8x128xf32>
    %c0_3 = arith.constant 0 : index
    %c0_4 = arith.constant 0 : index
    %11 = vector.load %arg3[%c0_3, %c0_4] : memref<1x128xf32, #tpu.memory_space<vmem>>, vector<1x128xf32>
    %12 = vector.broadcast %11 : vector<1x128xf32> to vector<8x128xf32>
    %13 = arith.addf %10, %12 : vector<8x128xf32>
    %14 = math.sin %13 : vector<8x128xf32>
    %c0_5 = arith.constant 0 : index
    %c0_6 = arith.constant 0 : index
    %15 = vector.load %arg4[%c0_5, %c0_6] : memref<8x128xf32, #tpu.memory_space<vmem>>, vector<8x128xf32>
    tpu.vector_store %arg4[%c0_5, %c0_6], %14 {strides = array<i32>} : memref<8x128xf32, #tpu.memory_space<vmem>>, vector<8x128xf32>,
    return
  }
  func.func @transform_0(%arg0: i32) -> (i32, i32) {
    %c0_i32 = arith.constant 0 : i32
    %c0_i32_0 = arith.constant 0 : i32
    return %arg0, %c0_i32 : i32, i32
  }
  func.func @transform_1(%arg0: i32) -> (i32, i32) {
    %c0_i32 = arith.constant 0 : i32
    %c0_i32_0 = arith.constant 0 : i32
    %c0_i32_1 = arith.constant 0 : i32
    return %c0_i32, %c0_i32_0 : i32, i32
  }
  func.func @transform_2(%arg0: i32) -> (i32, i32) {
    %c0_i32 = arith.constant 0 : i32
    %c0_i32_0 = arith.constant 0 : i32
    %c0_i32_1 = arith.constant 0 : i32
    return %c0_i32, %c0_i32_0 : i32, i32
  }
  func.func @transform_3(%arg0: i32) -> (i32, i32) {
    %c0_i32 = arith.constant 0 : i32
    %c0_i32_0 = arith.constant 0 : i32
    return %arg0, %c0_i32 : i32, i32
  }
}

</mosaic_0001>

<llo_original>
// kernel: tpu_custom_call.1
$region0: #{tpu_custom_call.1}
  #allocation0 [shape = 'u32[]', space=smem, size = 0x4, offset = 0x4, fixed_abs, tag = 'smem constant byte address 0x4 - core index']
  #allocation1 [shape = 'u32[144,128]{1,0:T(1,128)}', space=vmem, size = 0x12000, scoped, tag = 'internal scratch']
  %s0 = inlined_call_operand.vmem [shape: f32[8,2], index: 0, kind: input, shape index: {}]
  %s1 = inlined_call_operand.vmem [shape: f32[1,128], index: 1, kind: input, shape index: {}]
  %s2 = inlined_call_operand.vmem [shape: f32[1,128], index: 2, kind: input, shape index: {}]
  %s3 = inlined_call_operand.hbm [shape: f32[8,128], index: 3, kind: output, shape index: {}]
  %s4 = sld [smem:[#allocation0]]
  $region22: #{tpu_custom_call.1} parent=0
    _
  %s6 = ssub.s32 1, %s4
  %s7 = scalar_select 0, %s6, %s4
  $region1: #{tpu_custom_call.1} parent=0
    #allocation2 [shape = 'u8[4096]{0}', space=vmem, size = 0x1000, scoped, tag = 'output window, operand 0, single buffered']
    #allocation3 [shape = 's32[1]{0}', space=sflag, size = 0x4, scoped, tag = 'scoped memory for tpu_custom_call.1']
    %8 = vsyncpa [#allocation3], 0
    // Predicated region
    $region2: #{tpu_custom_call.1} parent=1 // pred_check
      _
    $region3: #{tpu_custom_call.1} parent=1 // pred_check_branch
      %10 = sbr.rel (0) target = $region5
    $region4: #{tpu_custom_call.1} parent=1 // pred_region
      _
    $region5: #{tpu_custom_call.1} parent=1 // pred_fallthru
      _
    // Predicated region
    $region6: #{tpu_custom_call.1} parent=1 // pred_check
      _
    $region7: #{tpu_custom_call.1} parent=1 // pred_check_branch
      %12 = sbr.rel (0) target = $region9
    $region8: #{tpu_custom_call.1} parent=1 // pred_region
      _
    $region9: #{tpu_custom_call.1} parent=1 // pred_fallthru
      _
    // Predicated region
    $region10: #{tpu_custom_call.1} parent=1 // pred_check
      _
    $region11: #{tpu_custom_call.1} parent=1 // pred_check_branch
      %14 = sbr.rel (0) target = $region13
    $region12: #{tpu_custom_call.1} parent=1 // pred_region
      _
    $region13: #{tpu_custom_call.1} parent=1 // pred_fallthru
      _
    %v15 = vld [vmem:[%s0] sm:$0xff]
    %17 = vset.pattern.permute.xlu0 0
    %18 = vperm.xlu0 %17, %v15
    %v19 = vpop.permute.xlu0 %18
    %21 = vset.pattern.permute.xlu0 1
    %22 = vperm.xlu0 %21, %v15
    %v23 = vpop.permute.xlu0 %22
    %vm25 = vcmask 523264
    %v26 = vsel %vm25, %v19, %v23
    %v27 = vld [vmem:[%s1] sm:$0x1]
    %v29 = vlaneseq
    %v30 = vshrl.u32 %v29, 7
    %v31 = vsub.s32 0, %v30
    %v32 = vrot.slane %v27, %v31
    %v34 = vmul.f32 %v26, %v32
    %v35 = vld [vmem:[%s2] sm:$0x1]
    %v37 = vlaneseq
    %v38 = vshrl.u32 %v37, 7
    %v39 = vsub.s32 0, %v38
    %v40 = vrot.slane %v35, %v39
    %v42 = vadd.f32 %v34, %v40
    %v43 = vand.u32 2147483647, %v42
    %vm44 = vcmp.le.f32.partialorder %v43, 0.7853982
    %vm45 = vcmp.lt.s32.totalorder %v42, 0
    %v46 = vand.u32 %v42, 2139095040
    %v47 = vshrl.u32 %v46, 23
    %v48 = vsub.s32 %v47, 127
    %v49 = vand.u32 2147483647, %v42
    %v50 = vand.u32 %v49, 8388607
    %v51 = vor.u32 %v50, 8388608
    %v52 = vsub.s32 0, %v51
    %v53 = vadd.s32 %v48, 1
    %vm54 = vcmp.gt.s32.totalorder %v53, 0
    %v55 = vsel %vm54, %v53, 0
    %v56 = vshrl.u32 %v55, 5
    %v57 = vand.u32 %v55, 31
    %v58 = vsub.s32 32, %v57
    %v59 = vshrl.u32 683565275, %v58
    %v60 = vshll.u32 683565275, %v57
    %v61 = vshrl.u32 2475754826, %v58
    %v62 = vor.u32 %v60, %v61
    %v63 = vshll.u32 2475754826, %v57
    %v64 = vshrl.u32 2131351028, %v58
    %v65 = vor.u32 %v63, %v64
    %v66 = vshll.u32 2131351028, %v57
    %v67 = vshrl.u32 2102212464, %v58
    %v68 = vor.u32 %v66, %v67
    %v69 = vshll.u32 2102212464, %v57
    %v70 = vshrl.u32 920167782, %v58
    %v71 = vor.u32 %v69, %v70
    %v72 = vshll.u32 920167782, %v57
    %v73 = vshrl.u32 1326507024, %v58
    %v74 = vor.u32 %v72, %v73
    %vm75 = vcmp.lt.s32.totalorder %v56, 1
    %vm76 = vcmp.lt.s32.totalorder %v56, 2
    %vm77 = vcmp.lt.s32.totalorder %v56, 3
    %vm78 = vcmp.lt.s32.totalorder %v56, 4
    %v79 = vsel %vm75, %v59, %v62
    %v80 = vsel %vm78, %v68, 2102212464
    %v81 = vsel %vm77, %v65, %v80
    %v82 = vsel %vm76, %v79, %v81
    %v83 = vsel %vm75, %v62, %v65
    %v84 = vsel %vm78, %v71, 920167782
    %v85 = vsel %vm77, %v68, %v84
    %v86 = vsel %vm76, %v83, %v85
    %v87 = vsel %vm75, %v65, %v68
    %v88 = vsel %vm78, %v74, 1326507024
    %v89 = vsel %vm77, %v71, %v88
    %v90 = vsel %vm76, %v87, %v89
    %v91 = vshll.u32 %v51, 8
    %v92 = vmul.u32.u64.compose %v91, %v90
    %v93 = vextract.low.u32 %v92
    %v94 = vextract.high.u32 %v92
    %v95 = vmul.u32.u64.compose %v91, %v86
    %v96 = vextract.low.u32 %v95
    %v97 = vextract.high.u32 %v95
    %v98 = vmul.u32 %v91, %v82
    %v99 = vadd.s32 %v94, %v96
    %vm100 = vc.u32 %v94, %v96
    %v101 = vadd.s32 %v97, 1
    %v102 = vsel %vm100, %v101, %v97
    %v103 = vadd.s32 %v98, %v102
    %v104 = vadd.s32 %v103, 536870912
    %v105 = vshrl.u32 %v104, 30
    %v106 = vshll.u32 %v105, 30
    %v107 = vsub.s32 %v103, %v106
    %vm108 = vcmp.lt.s32.totalorder %v107, 0
    %v109 = vsub.s32 0, %v107
    %v110 = vsel %vm108, %v109, %v107
    %v111 = vclz %v110
    %v112 = vsub.s32 %v111, 2
    %vm113 = vcmp.gt.s32.totalorder 0, %v112
    %v114 = vsel %vm113, 0, %v112
    %v115 = vsub.s32 32, %v114
    %v116 = vshll.u32 %v107, %v114
    %v117 = vshrl.u32 %v99, %v115
    %v118 = vor.u32 %v116, %v117
    %v119 = vsub.s32 4294967266, %v114
    %v120 = vadd.s32 %v119, 127
    %v121 = vshll.u32 %v120, 23
    %v122 = vor.u32 4788187, %v121
    %v123 = vand.u32 2147483647, %v122
    %v125 = vcvt.s32.f32 %v118
    %v126 = vmul.f32 %v125, %v123
    %v127 = vxor.u32 %v126, 2147483648
    %v128 = vsel %vm45, %v127, %v126
    %v129 = vsub.s32 4, %v105
    %v130 = vsel %vm45, %v129, %v105
    %v131 = vsel %vm44, %v42, %v128
    %v132 = vsel %vm44, 0, %v130
    %v133 = vcosq.f32.pop %v131
    %v134 = vsinq.f32.pop %v131
    %vm135 = vweird.f32 %v42
    %v136 = vadd.s32 %v132, 3
    %v137 = vand.u32 %v136, 3
    %vm138 = vcmp.lt.s32.totalorder %v137, 2
    %vm139 = vcmp.eq.s32.totalorder %v137, 0
    %v140 = vxor.u32 %v134, 2147483648
    %v141 = vsel %vm139, %v133, %v140
    %vm142 = vcmp.eq.s32.totalorder %v137, 2
    %v143 = vxor.u32 %v133, 2147483648
    %v144 = vsel %vm142, %v143, %v134
    %v145 = vsel %vm138, %v141, %v144
    %v146 = vsel %vm135, nan, %v145
    %147 = vst [vmem:[#allocation2] sm:$0xff] %v146
    // Predicated region
    $region14: #{tpu_custom_call.1} parent=1 // pred_check
      _
    $region15: #{tpu_custom_call.1} parent=1 // pred_check_branch
      %149 = sbr.rel (0) target = $region17
    $region16: #{tpu_custom_call.1} parent=1 // pred_region
      %s151 = ssub.s32 128, 128
      %152 = vsyncadd [#allocation3], %s151
      %s154 = sshll.u32 [#allocation2], 4
      %s155 = int_to_ptr.vmem [resolvable:$true] %s154
      %157 = dma.vmem_to_hbm [thread:$0]  %s155, 128, %s3, [#allocation3]
    $region17: #{tpu_custom_call.1} parent=1 // pred_fallthru
      _
    // Predicated region
    $region18: #{tpu_custom_call.1} parent=1 // pred_check
      _
    $region19: #{tpu_custom_call.1} parent=1 // pred_check_branch
      %159 = sbr.rel (0) target = $region21
    $region20: #{tpu_custom_call.1} parent=1 // pred_region
      %160 = dma.done [#allocation3], 128
    $region21: #{tpu_custom_call.1} parent=1 // pred_fallthru
      _
    %161 = vsyncpa [#allocation3], 1

</llo_original>
